<compile_context>
chip_gen: v6e
topology: v6e:2x2x1
jax: 0.10.0
libtpu: 0.0.40
codegen_flags: <defaults>
</compile_context>

<pallas_src>
import functools

import jax
import jax.numpy as jnp
from jax.experimental import pallas as pl
from jax.experimental.pallas import tpu as pltpu


_SUBLANE = 8       # f32 sublane tile (second-minor axis granularity)
_MAX_TM = 512      # upper bound on rows per grid step


def _round_up(n, m):
    return ((n + m - 1) // m) * m


# ------------------------- per-generation VMEM budget ---------------------- #

@functools.lru_cache(maxsize=1)
def _tpu_vmem_capacity_bytes():
    """Physical VMEM per TensorCore (128 MiB on v5e/v6e, 64 MiB on v7x)."""
    try:
        return int(pltpu.get_tpu_info().vmem_capacity_bytes)
    except Exception:
        return 64 * 1024 * 1024        # conservative fallback: v7x per-TC VMEM


def _vmem_budget_bytes():
    """What this kernel plans to occupy (leave headroom for compiler temps)."""
    return _tpu_vmem_capacity_bytes() // 2


def _vmem_limit_bytes():
    """Explicit scoped-VMEM limit handed to the compiler (default is only
    16/32 MiB depending on generation)."""
    return (_tpu_vmem_capacity_bytes() * 3) // 4


def _pick_tm(batch, per_row_bytes, resident_bytes):
    """Rows per grid step.

    * equal to the batch if the batch is tiny (== full-dim BlockSpec exception)
    * otherwise a multiple of 8, capped at _MAX_TM
    * at least 2 grid steps when possible so ("parallel",) actually shards the
      batch across both TensorCores on v7x
    * clamped so double-buffered activation tiles + resident weights fit the
      per-generation VMEM budget.
    """
    if batch <= _SUBLANE:
        return batch
    # Split the batch roughly in two for the v7x megacore; cap the tile size.
    tm = min(_MAX_TM, _round_up(-(-batch // 2), _SUBLANE))
    # VMEM clamp: budget minus the single-buffered resident weights.
    avail = max(_vmem_budget_bytes() - resident_bytes, _SUBLANE * per_row_bytes)
    tm_cap = max(_SUBLANE, (avail // per_row_bytes) // _SUBLANE * _SUBLANE)
    return max(_SUBLANE, min(tm, tm_cap))


# ----------------------------- Pallas kernels ------------------------------ #

def _fused_chain_kernel(*refs, ops, compute_dtype):
    """Fused chain of Linear / ReLU ops, executed entirely in VMEM.

    refs = (x_ref, w0_ref, b0_ref, w1_ref, b1_ref, ..., o_ref)
    ops  = tuple of "linear" / "relu" describing the module chain.
    """
    x_ref = refs[0]
    o_ref = refs[-1]
    param_refs = refs[1:-1]

    y = x_ref[...]
    p = 0
    for op in ops:
        if op == "linear":
            w_ref = param_refs[p]
            b_ref = param_refs[p + 1]
            p += 2
            # MXU matmul: bf16 operands (cast in-kernel), f32 accumulation.
            y = jnp.dot(y.astype(compute_dtype), w_ref[...],
                        preferred_element_type=jnp.float32)
            y = y + b_ref[...].astype(jnp.float32)   # VPU epilogue, stays f32
        elif op == "relu":
            y = jnp.maximum(y, 0.0)                  # VPU, essentially free
        else:
            raise ValueError(f"unsupported op in fused chain: {op}")
    o_ref[...] = y.astype(o_ref.dtype)


def _relu_kernel(x_ref, o_ref):
    # Only used by the standalone ReLU fallback (never in the fused path).
    o_ref[...] = jnp.maximum(x_ref[...], 0.0)


# ----------------------------- Pallas wrappers ------------------------------ #

@functools.partial(jax.jit, static_argnames=("ops",))
def _fused_apply(x, flat_params, *, ops):
    """Run a fused Linear/ReLU chain in one pallas_call.

    x:           [batch, d_in]  (unpadded; passed straight through)
    flat_params: (w0, b0, w1, b1, ...)   w* in compute dtype, b* in f32
    """
    batch, d_in = x.shape
    d_out = flat_params[-1].shape[-1]          # width of the last bias

    # VMEM accounting: 2x double-buffered x/out tiles + f32 intermediates for
    # every layer width + single-buffered resident weights.
    widths = [d_in] + [p.shape[-1] for p in flat_params[1::2]]
    per_row = (2 * (d_in + d_out) * x.dtype.itemsize + 4 * sum(widths))
    resident = sum(int(p.size) * p.dtype.itemsize for p in flat_params)
    tm = _pick_tm(batch, per_row, resident)

    grid = (pl.cdiv(batch, tm),)               # ragged tail clipped by Pallas

    in_specs = [pl.BlockSpec((tm, d_in), lambda i: (i, 0))]
    # Weights / biases: whole-array, single-buffered VMEM residents.  Their
    # index map would be constant, so pipelined double-buffering would only
    # waste VMEM (matters most under v7x's 64 MiB/TC).
    in_specs += [pl.BlockSpec(memory_space=pltpu.MemorySpace.VMEM)
                 for _ in flat_params]

    kernel = functools.partial(_fused_chain_kernel, ops=ops,
                               compute_dtype=flat_params[0].dtype)
    return pl.pallas_call(
        kernel,
        out_shape=jax.ShapeDtypeStruct((batch, d_out), x.dtype),
        grid=grid,
        in_specs=in_specs,
        out_specs=pl.BlockSpec((tm, d_out), lambda i: (i, 0)),
        compiler_params=pltpu.CompilerParams(
            dimension_semantics=("parallel",),   # shard batch across TCs (v7x)
            vmem_limit_bytes=_vmem_limit_bytes()),
    )(x, *flat_params)


@jax.jit
def _relu_apply(x):
    """Standalone ReLU fallback (unused when ReLU is fused into the chain)."""
    return pl.pallas_call(
        _relu_kernel,
        out_shape=jax.ShapeDtypeStruct(x.shape, x.dtype),
    )(x)


# ------------------------- Module / Sequential glue ------------------------ #

class Linear:
    """Pallas-backed analogue of nn.Linear(in_features, out_features).

    Master weights are f32.  A compute-dtype (bf16 by default) copy of W is
    materialized once at construction so the fused kernel's MXU path runs in
    bf16 with f32 accumulation, with no per-call wrapper casts.  Bias stays
    f32 (the bias-add / ReLU epilogue runs on the VPU in f32).
    """

    def __init__(self, key, in_features, out_features,
                 dtype=jnp.float32, compute_dtype=jnp.bfloat16):
        kw, kb = jax.random.split(key)
        bound = 1.0 / float(in_features) ** 0.5
        self.in_features = in_features
        self.out_features = out_features

        self.w = jax.random.uniform(
            kw, (in_features, out_features), dtype, minval=-bound, maxval=bound)
        self.b = jax.random.uniform(
            kb, (1, out_features), dtype, minval=-bound, maxval=bound)
        # One-time cast for the MXU (pass compute_dtype=jnp.float32 for exact).
        self.w_c = self.w.astype(compute_dtype)

    def forward(self, x):
        # Standalone path: a one-op fused chain (same kernel, jitted once).
        return _fused_apply(x, (self.w_c, self.b), ops=("linear",))


class ReLU:
    """Pallas-backed analogue of nn.ReLU()."""

    def forward(self, x):
        return _relu_apply(x)


class Sequential:
    """Mirror of the PyTorch Sequential: registers modules by string id and
    chains their forward passes.  When every submodule is a Linear or ReLU,
    the whole chain is fused into a single Pallas kernel (identical math, no
    HBM round-trips for intermediates, no wrapper-side pads or slices)."""

    def __init__(self, *modules):
        self._modules = {}
        for id, module in enumerate(modules):
            self._modules[str(id)] = module

    def forward(self, x):
        mods = list(self._modules.values())
        if mods and all(isinstance(m, (Linear, ReLU)) for m in mods) and \
                any(isinstance(m, Linear) for m in mods):
            # Fused fast path: one pallas_call for the entire chain.
            ops = []
            flat_params = []
            for m in mods:
                if isinstance(m, Linear):
                    ops.append("linear")
                    flat_params.extend([m.w_c, m.b])
                else:
                    ops.append("relu")
            return _fused_apply(x, tuple(flat_params), ops=tuple(ops))

        # Generic fallback: chain module forwards, exactly like nn.Sequential.
        for _, module in self._modules.items():
            x = module.forward(x)
        return x

    __call__ = forward


# ---------------------------------- main ----------------------------------- #

if __name__ == "__main__":
    key = jax.random.PRNGKey(0)
    k_x, k_l1, k_l2 = jax.random.split(key, 3)

    batch, d_in, d_hidden, d_out = 2, 32, 64, 16
    x = jax.random.normal(k_x, (batch, d_in), dtype=jnp.float32)

    model = Sequential(
        Linear(k_l1, d_in, d_hidden),
        ReLU(),
        Linear(k_l2, d_hidden, d_out),
    )

    y = jax.block_until_ready(model(x))

    # Reference check in plain JAX on the f32 master weights.  The kernel's
    # MXU path is bf16 with f32 accumulation, so the tolerance is relaxed
    # accordingly (per the performance-review correctness note).
    l1, l2 = model._modules["0"], model._modules["2"]
    hi = jax.lax.Precision.HIGHEST
    h = jnp.maximum(jnp.dot(x, l1.w, precision=hi) + l1.b, 0.0)
    ref = jnp.dot(h, l2.w, precision=hi) + l2.b

    assert y.shape == (batch, d_out)
    max_err = float(jnp.max(jnp.abs(y - ref)))
    assert jnp.allclose(y, ref, atol=5e-2, rtol=5e-2), max_err

    print("KERNEL_OK")
</pallas_src>

<mosaic_0001>
module attributes {stable_mosaic.version = 11 : i64} {
  func.func @_fused_chain_kernel(%arg0: i32, %arg1: memref<2x32xf32, #tpu.memory_space<vmem>>, %arg2: memref<32x64xbf16, #tpu.memory_space<vmem>>, %arg3: memref<1x64xf32, #tpu.memory_space<vmem>>, %arg4: memref<64x16xbf16, #tpu.memory_space<vmem>>, %arg5: memref<1x16xf32, #tpu.memory_space<vmem>>, %arg6: memref<2x16xf32, #tpu.memory_space<vmem>>) attributes {dimension_semantics = [#tpu.dimension_semantics<parallel>], iteration_bounds = array<i64: 1>, scalar_prefetch = 0 : i64, scratch_operands = 0 : i64, tpu.core_type = #tpu.core_type<tc>, window_params = [{transform_indices = @transform_0, window_bounds = array<i64: 2, 32>}, {pipeline_mode = #tpu.pipeline_mode<synchronous>, transform_indices = @transform_1, window_bounds = array<i64: 32, 64>}, {pipeline_mode = #tpu.pipeline_mode<synchronous>, transform_indices = @transform_2, window_bounds = array<i64: 1, 64>}, {pipeline_mode = #tpu.pipeline_mode<synchronous>, transform_indices = @transform_3, window_bounds = array<i64: 64, 16>}, {pipeline_mode = #tpu.pipeline_mode<synchronous>, transform_indices = @transform_4, window_bounds = array<i64: 1, 16>}, {transform_indices = @transform_5, window_bounds = array<i64: 2, 16>}]} {
    %c0 = arith.constant 0 : index
    %c0_0 = arith.constant 0 : index
    %0 = vector.load %arg1[%c0, %c0_0] : memref<2x32xf32, #tpu.memory_space<vmem>>, vector<2x32xf32>
    %1 = arith.truncf %0 : vector<2x32xf32> to vector<2x32xbf16>
    %c0_1 = arith.constant 0 : index
    %c0_2 = arith.constant 0 : index
    %2 = vector.load %arg2[%c0_1, %c0_2] : memref<32x64xbf16, #tpu.memory_space<vmem>>, vector<32x64xbf16>
    %cst = arith.constant dense<0.000000e+00> : vector<2x64xf32>
    %3 = tpu.matmul %1, %2, %cst {dimension_numbers = #tpu.dot_dimension_numbers<[1], [0], [0], [1], [0, 0, 1, 1], [], []>} : vector<2x32xbf16>, vector<32x64xbf16>, vector<2x64xf32> -> vector<2x64xf32>
    %c0_3 = arith.constant 0 : index
    %c0_4 = arith.constant 0 : index
    %4 = vector.load %arg3[%c0_3, %c0_4] : memref<1x64xf32, #tpu.memory_space<vmem>>, vector<1x64xf32>
    %5 = vector.broadcast %4 : vector<1x64xf32> to vector<2x64xf32>
    %6 = arith.addf %3, %5 : vector<2x64xf32>
    %cst_5 = arith.constant 0.000000e+00 : f32
    %7 = vector.broadcast %cst_5 : f32 to vector<2x64xf32>
    %8 = arith.maximumf %6, %7 : vector<2x64xf32>
    %9 = arith.truncf %8 : vector<2x64xf32> to vector<2x64xbf16>
    %c0_6 = arith.constant 0 : index
    %c0_7 = arith.constant 0 : index
    %10 = vector.load %arg4[%c0_6, %c0_7] : memref<64x16xbf16, #tpu.memory_space<vmem>>, vector<64x16xbf16>
    %cst_8 = arith.constant dense<0.000000e+00> : vector<2x16xf32>
    %11 = tpu.matmul %9, %10, %cst_8 {dimension_numbers = #tpu.dot_dimension_numbers<[1], [0], [0], [1], [0, 0, 1, 1], [], []>} : vector<2x64xbf16>, vector<64x16xbf16>, vector<2x16xf32> -> vector<2x16xf32>
    %c0_9 = arith.constant 0 : index
    %c0_10 = arith.constant 0 : index
    %12 = vector.load %arg5[%c0_9, %c0_10] : memref<1x16xf32, #tpu.memory_space<vmem>>, vector<1x16xf32>
    %13 = vector.broadcast %12 : vector<1x16xf32> to vector<2x16xf32>
    %14 = arith.addf %11, %13 : vector<2x16xf32>
    %c0_11 = arith.constant 0 : index
    %c0_12 = arith.constant 0 : index
    %15 = vector.load %arg6[%c0_11, %c0_12] : memref<2x16xf32, #tpu.memory_space<vmem>>, vector<2x16xf32>
    tpu.vector_store %arg6[%c0_11, %c0_12], %14 {strides = array<i32>} : memref<2x16xf32, #tpu.memory_space<vmem>>, vector<2x16xf32>,
    return
  }
  func.func @transform_0(%arg0: i32) -> (i32, i32) {
    %c0_i32 = arith.constant 0 : i32
    %c0_i32_0 = arith.constant 0 : i32
    return %arg0, %c0_i32 : i32, i32
  }
  func.func @transform_1(%arg0: i32) -> (i32, i32) {
    %c0_i32 = arith.constant 0 : i32
    %c0_i32_0 = arith.constant 0 : i32
    %c0_i32_1 = arith.constant 0 : i32
    return %c0_i32, %c0_i32_0 : i32, i32
  }
  func.func @transform_2(%arg0: i32) -> (i32, i32) {
    %c0_i32 = arith.constant 0 : i32
    %c0_i32_0 = arith.constant 0 : i32
    %c0_i32_1 = arith.constant 0 : i32
    return %c0_i32, %c0_i32_0 : i32, i32
  }
  func.func @transform_3(%arg0: i32) -> (i32, i32) {
    %c0_i32 = arith.constant 0 : i32
    %c0_i32_0 = arith.constant 0 : i32
    %c0_i32_1 = arith.constant 0 : i32
    return %c0_i32, %c0_i32_0 : i32, i32
  }
  func.func @transform_4(%arg0: i32) -> (i32, i32) {
    %c0_i32 = arith.constant 0 : i32
    %c0_i32_0 = arith.constant 0 : i32
    %c0_i32_1 = arith.constant 0 : i32
    return %c0_i32, %c0_i32_0 : i32, i32
  }
  func.func @transform_5(%arg0: i32) -> (i32, i32) {
    %c0_i32 = arith.constant 0 : i32
    %c0_i32_0 = arith.constant 0 : i32
    return %arg0, %c0_i32 : i32, i32
  }
}

</mosaic_0001>

<llo_original>
// kernel: _fused_apply.1
$region0: #{_fused_apply.1}
  #allocation0 [shape = 'u32[]', space=smem, size = 0x4, offset = 0x4, fixed_abs, tag = 'smem constant byte address 0x4 - core index']
  #allocation1 [shape = 'u32[144,128]{1,0:T(1,128)}', space=vmem, size = 0x12000, scoped, tag = 'internal scratch']
  %s0 = inlined_call_operand.vmem [shape: f32[2,32], index: 0, kind: input, shape index: {}]
  %s1 = inlined_call_operand.vmem [shape: bf16[32,64], index: 1, kind: input, shape index: {}]
  %s2 = inlined_call_operand.vmem [shape: f32[1,64], index: 2, kind: input, shape index: {}]
  %s3 = inlined_call_operand.vmem [shape: bf16[64,16], index: 3, kind: input, shape index: {}]
  %s4 = inlined_call_operand.vmem [shape: f32[1,16], index: 4, kind: input, shape index: {}]
  %s5 = inlined_call_operand.hbm [shape: f32[2,16], index: 5, kind: output, shape index: {}]
  %s6 = sld [smem:[#allocation0]]
  $region30: #{_fused_apply.1} parent=0
    _
  %s8 = ssub.s32 1, %s6
  %s9 = scalar_select 0, %s8, %s6
  $region1: #{_fused_apply.1} parent=0
    #allocation2 [shape = 'u8[1024]{0}', space=vmem, size = 0x400, scoped, tag = 'output window, operand 0, single buffered']
    #allocation3 [shape = 's32[1]{0}', space=sflag, size = 0x4, scoped, tag = 'scoped memory for _fused_apply.1']
    %10 = vsyncpa [#allocation3], 0
    // Predicated region
    $region2: #{_fused_apply.1} parent=1 // pred_check
      _
    $region3: #{_fused_apply.1} parent=1 // pred_check_branch
      %12 = sbr.rel (0) target = $region5
    $region4: #{_fused_apply.1} parent=1 // pred_region
      _
    $region5: #{_fused_apply.1} parent=1 // pred_fallthru
      _
    // Predicated region
    $region6: #{_fused_apply.1} parent=1 // pred_check
      _
    $region7: #{_fused_apply.1} parent=1 // pred_check_branch
      %14 = sbr.rel (0) target = $region9
    $region8: #{_fused_apply.1} parent=1 // pred_region
      _
    $region9: #{_fused_apply.1} parent=1 // pred_fallthru
      _
    // Predicated region
    $region10: #{_fused_apply.1} parent=1 // pred_check
      _
    $region11: #{_fused_apply.1} parent=1 // pred_check_branch
      %16 = sbr.rel (0) target = $region13
    $region12: #{_fused_apply.1} parent=1 // pred_region
      _
    $region13: #{_fused_apply.1} parent=1 // pred_fallthru
      _
    // Predicated region
    $region14: #{_fused_apply.1} parent=1 // pred_check
      _
    $region15: #{_fused_apply.1} parent=1 // pred_check_branch
      %18 = sbr.rel (0) target = $region17
    $region16: #{_fused_apply.1} parent=1 // pred_region
      _
    $region17: #{_fused_apply.1} parent=1 // pred_fallthru
      _
    // Predicated region
    $region18: #{_fused_apply.1} parent=1 // pred_check
      _
    $region19: #{_fused_apply.1} parent=1 // pred_check_branch
      %20 = sbr.rel (0) target = $region21
    $region20: #{_fused_apply.1} parent=1 // pred_region
      _
    $region21: #{_fused_apply.1} parent=1 // pred_fallthru
      _
    %v22 = vld [vmem:[%s0] sm:$0x3]
    %v23 = vpack.c.bf16 %v22, %v22
    %v24 = vld [vmem:[%s1] sm:$0xf]
    %v25 = vld [vmem:[%s1 + $0x4] sm:$0xf]
    %v26 = vld [vmem:[%s1 + $0x8] sm:$0xf]
    %v27 = vld [vmem:[%s1 + $0xc] sm:$0xf]
    %v28 = vld [vmem:[%s2] sm:$0x1]
    %v30 = vlaneseq
    %v31 = vshrl.u32 %v30, 7
    %v32 = vsub.s32 0, %v31
    %v33 = vrot.slane %v28, %v32
    %v39 = vunpack.c.l.b16 %v24
    %v40 = vunpack.c.l.b16 %v25
    %v41 = vunpack.c.l.b16 %v26
    %v42 = vunpack.c.l.b16 %v27
    %v43 = vpack.c.b16 %v40, %v39
    %v44 = vpack.c.b16 %v42, %v41
    %vm47 = vcmask 261120
    %v49 = vsel %vm47, %v23, 0
    %51 = vmatprep.subr.bf16.mxu0 0
    %52 = vmatpush1.bf16.msra.mxu0 0
    %53 = vmatprep.subr.bf16.mxu0 0
    %54 = vmatpush1.bf16.msra.mxu0 0
    %55 = vmatprep.subr.bf16.mxu0 0
    %56 = vmatpush1.bf16.msra.mxu0 0
    %57 = vmatprep.subr.bf16.mxu0 0
    %58 = vmatpush1.bf16.msra.mxu0 0
    %59 = vmatprep.subr.bf16.mxu0 0
    %60 = vmatpush1.bf16.msra.mxu0 0
    %61 = vmatprep.subr.bf16.mxu0 0
    %62 = vmatpush1.bf16.msra.mxu0 0
    %63 = vmatprep.subr.bf16.mxu0 0
    %64 = vmatpush1.bf16.msra.mxu0 %v44
    %65 = vmatprep.subr.bf16.mxu0 0
    %66 = vmatpush1.bf16.msra.mxu0 %v43
    %67 = vmatprep.subr.bf16.mxu0 0
    %68 = vmatpush2.bf16.msra.mxu0 0
    %69 = vmatprep.subr.bf16.mxu0 0
    %70 = vmatpush2.bf16.msra.mxu0 0
    %71 = vmatprep.subr.bf16.mxu0 0
    %72 = vmatpush2.bf16.msra.mxu0 0
    %73 = vmatprep.subr.bf16.mxu0 0
    %74 = vmatpush2.bf16.msra.mxu0 0
    %75 = vmatprep.subr.bf16.mxu0 0
    %76 = vmatpush2.bf16.msra.mxu0 0
    %77 = vmatprep.subr.bf16.mxu0 0
    %78 = vmatpush2.bf16.msra.mxu0 0
    %79 = vmatprep.subr.bf16.mxu0 0
    %80 = vmatpush2.bf16.msra.mxu0 0
    %81 = vmatprep.subr.bf16.mxu0 0
    %82 = vmatpush2.bf16.msra.mxu0 0
    %83 = vmatprep.mubr.bf16.mxu0 0
    %84 = vmatmul.mubr.bf16.gmra.mxu0 %v49
    %v85 = vpop.f32.mrf.mxu0
    %v86 = vadd.f32 %v33, %v85
    %v87 = vpop.f32.mrf.mxu0
    %v88 = vpop.f32.mrf.mxu0
    %v89 = vpop.f32.mrf.mxu0
    %90 = vdwg.mxu0
    %v91 = vmax.f32 %v86, 0.0
    %v92 = vpack.c.bf16 %v91, %v91
    %v93 = vld [vmem:[%s3] sm:$0xf]
    %v94 = vld [vmem:[%s3 + $0x4] sm:$0xf]
    %v95 = vld [vmem:[%s3 + $0x8] sm:$0xf]
    %v96 = vld [vmem:[%s3 + $0xc] sm:$0xf]
    %v97 = vld [vmem:[%s3 + $0x10] sm:$0xf]
    %v98 = vld [vmem:[%s3 + $0x14] sm:$0xf]
    %v99 = vld [vmem:[%s3 + $0x18] sm:$0xf]
    %v100 = vld [vmem:[%s3 + $0x1c] sm:$0xf]
    %v101 = vld [vmem:[%s4] sm:$0x1]
    %v103 = vlaneseq
    %v104 = vshrl.u32 %v103, 7
    %v105 = vsub.s32 0, %v104
    %v106 = vrot.slane %v101, %v105
    %v116 = vunpack.c.l.b16 %v93
    %v117 = vunpack.c.l.b16 %v94
    %v118 = vunpack.c.l.b16 %v95
    %v119 = vunpack.c.l.b16 %v96
    %v120 = vunpack.c.l.b16 %v97
    %v121 = vunpack.c.l.b16 %v98
    %v122 = vunpack.c.l.b16 %v99
    %v123 = vunpack.c.l.b16 %v100
    %v124 = vpack.c.b16 %v117, %v116
    %v125 = vpack.c.b16 %v119, %v118
    %v126 = vpack.c.b16 %v121, %v120
    %v127 = vpack.c.b16 %v123, %v122
    %vm132 = vcmask 523264
    %v134 = vsel %vm132, %v92, 0
    %136 = vmatprep.subr.bf16.mxu0 0
    %137 = vmatpush1.bf16.msra.mxu0 0
    %138 = vmatprep.subr.bf16.mxu0 0
    %139 = vmatpush1.bf16.msra.mxu0 0
    %140 = vmatprep.subr.bf16.mxu0 0
    %141 = vmatpush1.bf16.msra.mxu0 0
    %142 = vmatprep.subr.bf16.mxu0 0
    %143 = vmatpush1.bf16.msra.mxu0 0
    %144 = vmatprep.subr.bf16.mxu0 0
    %145 = vmatpush1.bf16.msra.mxu0 %v127
    %146 = vmatprep.subr.bf16.mxu0 0
    %147 = vmatpush1.bf16.msra.mxu0 %v126
    %148 = vmatprep.subr.bf16.mxu0 0
    %149 = vmatpush1.bf16.msra.mxu0 %v125
    %150 = vmatprep.subr.bf16.mxu0 0
    %151 = vmatpush1.bf16.msra.mxu0 %v124
    %152 = vmatprep.subr.bf16.mxu0 0
    %153 = vmatpush2.bf16.msra.mxu0 0
    %154 = vmatprep.subr.bf16.mxu0 0
    %155 = vmatpush2.bf16.msra.mxu0 0
    %156 = vmatprep.subr.bf16.mxu0 0
    %157 = vmatpush2.bf16.msra.mxu0 0
    %158 = vmatprep.subr.bf16.mxu0 0
    %159 = vmatpush2.bf16.msra.mxu0 0
    %160 = vmatprep.subr.bf16.mxu0 0
    %161 = vmatpush2.bf16.msra.mxu0 0
    %162 = vmatprep.subr.bf16.mxu0 0
    %163 = vmatpush2.bf16.msra.mxu0 0
    %164 = vmatprep.subr.bf16.mxu0 0
    %165 = vmatpush2.bf16.msra.mxu0 0
    %166 = vmatprep.subr.bf16.mxu0 0
    %167 = vmatpush2.bf16.msra.mxu0 0
    %168 = vmatprep.mubr.bf16.mxu0 0
    %169 = vmatmul.mubr.bf16.gmra.mxu0 %v134
    %v170 = vpop.f32.mrf.mxu0
    %v171 = vadd.f32 %v106, %v170
    %v172 = vpop.f32.mrf.mxu0
    %v173 = vpop.f32.mrf.mxu0
    %v174 = vpop.f32.mrf.mxu0
    %175 = vdwg.mxu0
    %vm176 = vcmask 123904
    %177 = vst.msk [vmem:[#allocation2] sm:$0x3] %vm176, %v171
    // Predicated region
    $region22: #{_fused_apply.1} parent=1 // pred_check
      _
    $region23: #{_fused_apply.1} parent=1 // pred_check_branch
      %179 = sbr.rel (0) target = $region25
    $region24: #{_fused_apply.1} parent=1 // pred_region
      %s181 = ssub.s32 32, 32
      %182 = vsyncadd [#allocation3], %s181
      %s184 = sshll.u32 [#allocation2], 4
      %s185 = int_to_ptr.vmem [resolvable:$true] %s184
      %187 = dma.vmem_to_hbm [thread:$0]  %s185, 32, %s5, [#allocation3]
    $region25: #{_fused_apply.1} parent=1 // pred_fallthru
      _
    // Predicated region
    $region26: #{_fused_apply.1} parent=1 // pred_check
      _
    $region27: #{_fused_apply.1} parent=1 // pred_check_branch
      %189 = sbr.rel (0) target = $region29
    $region28: #{_fused_apply.1} parent=1 // pred_region
      %190 = dma.done [#allocation3], 32
    $region29: #{_fused_apply.1} parent=1 // pred_fallthru
      _
    %191 = vsyncpa [#allocation3], 1

</llo_original>
